<compile_context>
chip_gen: v7x
topology: tpu7x:2x2x1
jax: 0.10.0
libtpu: 0.0.40
codegen_flags: <defaults>
</compile_context>

<pallas_src>
import math
from functools import partial

import jax
import jax.numpy as jnp
from jax.experimental import pallas as pl
from jax.experimental.pallas import tpu as pltpu


def _projection_kernel(x_ref, w1_ref, b1_ref, w2_ref, b2_ref, o_ref,
                       *, b_blk, bf16_gelu):
    # x_ref : (b_blk, C_in, TN)   spatial tile of b_blk batch elements
    # w1_ref: (C_hid, C_in)       b1_ref: (C_hid, 1)   (biases kept f32)
    # w2_ref: (C_out, C_hid)      b2_ref: (C_out, 1)
    # o_ref : (b_blk, C_out, TN)
    for b in range(b_blk):                       # small, static -> unrolled
        x = x_ref[b]                                              # (C_in, TN)
        h = jnp.dot(w1_ref[...], x, preferred_element_type=jnp.float32)
        h = h + b1_ref[...]                                       # (C_hid, TN) f32
        # TODO(synk): PyTorch F.gelu defaults to the exact erf form; we use the
        # tanh approximation (erf lowering in Mosaic is not guaranteed); max
        # abs deviation is ~1e-3.
        if bf16_gelu:
            # bf16 GELU halves VPU/EUP slot pressure on v6e/v7x (bf16 VALU).
            h = jax.nn.gelu(h.astype(jnp.bfloat16), approximate=True)
        else:
            h = jax.nn.gelu(h, approximate=True)
        y = jnp.dot(w2_ref[...], h.astype(w2_ref.dtype),
                    preferred_element_type=jnp.float32)
        y = y + b2_ref[...]                                       # (C_out, TN)
        o_ref[b] = y.astype(o_ref.dtype)


def _round_up(n, m):
    return -(-n // m) * m


def _vmem_capacity_bytes():
    """Per-TensorCore VMEM capacity; conservative 64 MiB fallback (v7x)."""
    try:
        return int(pltpu.get_tpu_info().vmem_capacity_bytes)
    except Exception:
        return 64 * (1 << 20)


def _vmem_estimate(tn, b_blk, c_in, c_hid, c_out, in_item, out_item, w_item):
    """Rough VMEM footprint (bytes) of one pipelined grid step."""
    # Double-buffered input / output spatial blocks (sublane-padded channels).
    in_blk = 2 * b_blk * _round_up(c_in, 8) * tn * in_item
    out_blk = 2 * b_blk * _round_up(c_out, 8) * tn * out_item
    # f32 hidden intermediate (may spill to VMEM between the two dots).
    interm = 2 * _round_up(c_hid, 8) * tn * 4
    # Resident weights (lane-padded) + biases, x2 for buffering slack.
    params = 2 * (_round_up(c_hid, 8) * _round_up(c_in, 128)
                  + _round_up(c_out, 8) * _round_up(c_hid, 128)) * w_item \
             + 2 * (_round_up(c_hid, 8) + _round_up(c_out, 8)) * 128 * 4
    return in_blk + out_blk + interm + params


def projection_forward(x, w1, b1, w2, b2, *, compute_dtype=None):
    """Fused 1x1-conv -> GELU -> 1x1-conv (FNO Projection) via Pallas.

    Args:
      x:  (B, C_in, *spatial) input (NCHW for n_dim=2).
      w1: (C_hid, C_in) fc1 weight (kernel size 1 squeezed out).
      b1: (C_hid,)      fc1 bias.
      w2: (C_out, C_hid) fc2 weight.
      b2: (C_out,)       fc2 bias.
      compute_dtype: optional dtype (e.g. jnp.bfloat16) for x / W1 / W2.
        Dots always accumulate in f32; output keeps the original x dtype.
    Returns:
      (B, C_out, *spatial) output, same dtype as the incoming x.
    """
    out_dtype = x.dtype
    if compute_dtype is not None:
        x = x.astype(compute_dtype)
        w1 = w1.astype(compute_dtype)
        w2 = w2.astype(compute_dtype)

    B, C_in = x.shape[0], x.shape[1]
    spatial = x.shape[2:]
    HW = math.prod(spatial)
    C_hid = w1.shape[0]
    C_out = w2.shape[0]

    in_item = jnp.dtype(x.dtype).itemsize
    out_item = jnp.dtype(out_dtype).itemsize
    w_item = jnp.dtype(w1.dtype).itemsize
    bf16_gelu = jnp.dtype(x.dtype) == jnp.dtype(jnp.bfloat16)
    # TODO(synk): on v5e (no bf16 VALU) f32 GELU would be marginally cheaper;
    # keyed off dtype only to avoid brittle chip-version probing.

    # Free reshape (collapses contiguous trailing dims) -- no HBM copy.
    x_flat = x.reshape(B, C_in, HW)
    # Biases stay f32: added after the f32-accumulated dot.
    b1_col = b1.astype(jnp.float32).reshape(C_hid, 1)
    b2_col = b2.astype(jnp.float32).reshape(C_out, 1)

    def est(tn, b_blk):
        return _vmem_estimate(tn, b_blk, C_in, C_hid, C_out,
                              in_item, out_item, w_item)

    # ---- Generation-aware tile policy -------------------------------------
    capacity = _vmem_capacity_bytes()                   # 128 MiB v5e/v6e, 64 MiB v7x
    budget = int(0.45 * capacity)                       # ~45% of VMEM for the pipeline
    tn_cap = 16384 if capacity >= 96 * (1 << 20) else 8192

    if HW <= tn_cap:
        tn = HW                                         # full dim (always legal)
    else:
        tn = (tn_cap // 128) * 128                      # lane-aligned
    # Shrink against the budget; also covers the tn == HW (non-multiple) case.
    while tn > 128 and est(tn, 1) > budget:
        tn = max(128, _round_up(max(tn // 2, 1), 128))

    # ---- Batch blocking: keep per-step DMAs large when HW is small ---------
    per_batch_bytes = (C_in * in_item + C_out * out_item) * tn
    target_step_bytes = 512 << 10                       # ~512 KiB per grid step
    b_blk = max(1, min(B, target_step_bytes // max(per_batch_bytes, 1)))
    while b_blk > 1 and est(tn, b_blk) > budget:
        b_blk = max(1, b_blk // 2)

    # Keep >= 2 total grid steps so both v7x TensorCores get work
    # (both grid axes are "parallel"; no-op on single-TC v5e/v6e).
    if pl.cdiv(B, b_blk) * pl.cdiv(HW, tn) < 2:
        if B >= 2:
            b_blk = min(b_blk, (B + 1) // 2)
        elif HW > 128:
            tn_half = _round_up(pl.cdiv(HW, 2), 128)
            if tn_half < HW:
                tn = tn_half

    n_b = pl.cdiv(B, b_blk)
    n_sp = pl.cdiv(HW, tn)
    grid = (n_b, n_sp)

    # Per-generation VMEM limit: ~56 MiB cap on v7x (64 MiB physical),
    # up to ~100 MiB on v5e/v6e (128 MiB physical).
    limit_cap = 56 * (1 << 20) if capacity <= 64 * (1 << 20) else 100 * (1 << 20)
    vmem_limit = int(min(limit_cap, max(2 * est(tn, b_blk), 16 * (1 << 20))))

    kernel = partial(_projection_kernel, b_blk=b_blk, bf16_gelu=bf16_gelu)

    out_flat = pl.pallas_call(
        kernel,
        out_shape=jax.ShapeDtypeStruct((B, C_out, HW), out_dtype),
        grid_spec=pltpu.PrefetchScalarGridSpec(
            num_scalar_prefetch=0,
            grid=grid,
            in_specs=[
                pl.BlockSpec((b_blk, C_in, tn), lambda i, j: (i, 0, j)),  # x tile
                pl.BlockSpec((C_hid, C_in), lambda i, j: (0, 0)),         # W1
                pl.BlockSpec((C_hid, 1), lambda i, j: (0, 0)),            # b1
                pl.BlockSpec((C_out, C_hid), lambda i, j: (0, 0)),        # W2
                pl.BlockSpec((C_out, 1), lambda i, j: (0, 0)),            # b2
            ],
            out_specs=pl.BlockSpec((b_blk, C_out, tn), lambda i, j: (i, 0, j)),
        ),
        compiler_params=pltpu.CompilerParams(
            dimension_semantics=("parallel", "parallel"),
            vmem_limit_bytes=vmem_limit,
        ),
    )(x_flat, w1, b1_col, w2, b2_col)

    return out_flat.reshape(B, C_out, *spatial)


def init_projection_params(key, in_channels, hidden_channels, out_channels,
                           dtype=jnp.float32):
    """Init mirroring nn.Conv2d(ci, co, 1) defaults for fc1 and fc2."""
    k1w, k1b, k2w, k2b = jax.random.split(key, 4)

    def conv_init(kw, kb, ci, co):
        w_bound = math.sqrt(1.0 / ci) * math.sqrt(3.0)  # kaiming_uniform(a=sqrt(5))
        b_bound = math.sqrt(1.0 / ci)
        w = jax.random.uniform(kw, (co, ci), dtype, minval=-w_bound,
                               maxval=w_bound)
        b = jax.random.uniform(kb, (co,), dtype, minval=-b_bound,
                               maxval=b_bound)
        return w, b

    w1, b1 = conv_init(k1w, k1b, in_channels, hidden_channels)
    w2, b2 = conv_init(k2w, k2b, hidden_channels, out_channels)
    return w1, b1, w2, b2


if __name__ == "__main__":
    key = jax.random.PRNGKey(0)
    k_x, k_p = jax.random.split(key)

    # Projection: high-dim latent -> low-dim output, 2-layer MLP of 1x1 convs.
    B, C_in, H, W = 2, 32, 16, 16
    C_hid, C_out = 32, 4

    x = jax.random.normal(k_x, (B, C_in, H, W), jnp.float32)
    w1, b1, w2, b2 = init_projection_params(k_p, C_in, C_hid, C_out)

    # Reference: plain JAX 1x1 convs + GELU (same tanh approximation).
    h_ref = jnp.einsum("bchw,oc->bohw", x, w1) + b1[None, :, None, None]
    h_ref = jax.nn.gelu(h_ref, approximate=True)
    y_ref = jnp.einsum("bchw,oc->bohw", h_ref, w2) + b2[None, :, None, None]

    # f32 path: matches the PyTorch module numerics (modulo tanh-gelu).
    y = jax.block_until_ready(projection_forward(x, w1, b1, w2, b2))
    assert y.shape == (B, C_out, H, W)
    assert jnp.allclose(y, y_ref, atol=1e-3, rtol=1e-3), \
        f"f32 max abs err {jnp.max(jnp.abs(y - y_ref))}"

    # bf16 compute path: halves HBM traffic, f32 accumulation in both dots.
    y_bf16 = jax.block_until_ready(
        projection_forward(x, w1, b1, w2, b2, compute_dtype=jnp.bfloat16))
    assert y_bf16.shape == (B, C_out, H, W)
    assert jnp.allclose(y_bf16, y_ref, atol=2e-1, rtol=5e-2), \
        f"bf16 max abs err {jnp.max(jnp.abs(y_bf16 - y_ref))}"

    print("KERNEL_OK")
</pallas_src>

<mosaic_0001>
module attributes {stable_mosaic.version = 11 : i64} {
  func.func @_projection_kernel(%arg0: i32, %arg1: i32, %arg2: memref<1x32x256xf32, #tpu.memory_space<vmem>>, %arg3: memref<32x32xf32, #tpu.memory_space<vmem>>, %arg4: memref<32x1xf32, #tpu.memory_space<vmem>>, %arg5: memref<4x32xf32, #tpu.memory_space<vmem>>, %arg6: memref<4x1xf32, #tpu.memory_space<vmem>>, %arg7: memref<1x4x256xf32, #tpu.memory_space<vmem>>) attributes {dimension_semantics = [#tpu.dimension_semantics<parallel>, #tpu.dimension_semantics<parallel>], iteration_bounds = array<i64: 2, 1>, scalar_prefetch = 0 : i64, scratch_operands = 0 : i64, tpu.core_type = #tpu.core_type<tc>, window_params = [{transform_indices = @transform_0, window_bounds = array<i64: 1, 32, 256>}, {pipeline_mode = #tpu.pipeline_mode<synchronous>, transform_indices = @transform_1, window_bounds = array<i64: 32, 32>}, {pipeline_mode = #tpu.pipeline_mode<synchronous>, transform_indices = @transform_2, window_bounds = array<i64: 32, 1>}, {pipeline_mode = #tpu.pipeline_mode<synchronous>, transform_indices = @transform_3, window_bounds = array<i64: 4, 32>}, {pipeline_mode = #tpu.pipeline_mode<synchronous>, transform_indices = @transform_4, window_bounds = array<i64: 4, 1>}, {transform_indices = @transform_5, window_bounds = array<i64: 1, 4, 256>}]} {
    %c0 = arith.constant 0 : index
    %c0_0 = arith.constant 0 : index
    %c0_1 = arith.constant 0 : index
    %0 = vector.load %arg2[%c0, %c0_0, %c0_1] : memref<1x32x256xf32, #tpu.memory_space<vmem>>, vector<1x32x256xf32>
    %1 = vector.shape_cast %0 : vector<1x32x256xf32> to vector<32x256xf32>
    %c0_2 = arith.constant 0 : index
    %c0_3 = arith.constant 0 : index
    %2 = vector.load %arg3[%c0_2, %c0_3] : memref<32x32xf32, #tpu.memory_space<vmem>>, vector<32x32xf32>
    %cst = arith.constant dense<0.000000e+00> : vector<32x256xf32>
    %3 = tpu.matmul %2, %1, %cst {dimension_numbers = #tpu.dot_dimension_numbers<[1], [0], [0], [1], [0, 0, 1, 1], [], []>} : vector<32x32xf32>, vector<32x256xf32>, vector<32x256xf32> -> vector<32x256xf32>
    %c0_4 = arith.constant 0 : index
    %c0_5 = arith.constant 0 : index
    %4 = vector.load %arg4[%c0_4, %c0_5] : memref<32x1xf32, #tpu.memory_space<vmem>>, vector<32x1xf32>
    %5 = vector.broadcast %4 : vector<32x1xf32> to vector<32x256xf32>
    %6 = arith.addf %3, %5 : vector<32x256xf32>
    %7 = arith.mulf %6, %6 : vector<32x256xf32>
    %8 = arith.mulf %6, %7 : vector<32x256xf32>
    %cst_6 = arith.constant 4.471500e-02 : f32
    %9 = vector.broadcast %cst_6 : f32 to vector<32x256xf32>
    %10 = arith.mulf %9, %8 : vector<32x256xf32>
    %11 = arith.addf %6, %10 : vector<32x256xf32>
    %cst_7 = arith.constant 0.797884583 : f32
    %12 = vector.broadcast %cst_7 : f32 to vector<32x256xf32>
    %13 = arith.mulf %12, %11 : vector<32x256xf32>
    %14 = math.tanh %13 : vector<32x256xf32>
    %cst_8 = arith.constant 1.000000e+00 : f32
    %15 = vector.broadcast %cst_8 : f32 to vector<32x256xf32>
    %16 = arith.addf %15, %14 : vector<32x256xf32>
    %cst_9 = arith.constant 5.000000e-01 : f32
    %17 = vector.broadcast %cst_9 : f32 to vector<32x256xf32>
    %18 = arith.mulf %17, %16 : vector<32x256xf32>
    %19 = arith.mulf %6, %18 : vector<32x256xf32>
    %c0_10 = arith.constant 0 : index
    %c0_11 = arith.constant 0 : index
    %20 = vector.load %arg5[%c0_10, %c0_11] : memref<4x32xf32, #tpu.memory_space<vmem>>, vector<4x32xf32>
    %cst_12 = arith.constant dense<0.000000e+00> : vector<4x256xf32>
    %21 = tpu.matmul %20, %19, %cst_12 {dimension_numbers = #tpu.dot_dimension_numbers<[1], [0], [0], [1], [0, 0, 1, 1], [], []>} : vector<4x32xf32>, vector<32x256xf32>, vector<4x256xf32> -> vector<4x256xf32>
    %c0_13 = arith.constant 0 : index
    %c0_14 = arith.constant 0 : index
    %22 = vector.load %arg6[%c0_13, %c0_14] : memref<4x1xf32, #tpu.memory_space<vmem>>, vector<4x1xf32>
    %23 = vector.broadcast %22 : vector<4x1xf32> to vector<4x256xf32>
    %24 = arith.addf %21, %23 : vector<4x256xf32>
    %c0_15 = arith.constant 0 : index
    %c0_16 = arith.constant 0 : index
    %c0_17 = arith.constant 0 : index
    %25 = vector.load %arg7[%c0_15, %c0_16, %c0_17] : memref<1x4x256xf32, #tpu.memory_space<vmem>>, vector<1x4x256xf32>
    %26 = vector.shape_cast %25 : vector<1x4x256xf32> to vector<4x256xf32>
    %27 = vector.shape_cast %24 : vector<4x256xf32> to vector<1x4x256xf32>
    tpu.vector_store %arg7[%c0_15, %c0_16, %c0_17], %27 {strides = array<i32>} : memref<1x4x256xf32, #tpu.memory_space<vmem>>, vector<1x4x256xf32>,
    return
  }
  func.func @transform_0(%arg0: i32, %arg1: i32) -> (i32, i32, i32) {
    %c0_i32 = arith.constant 0 : i32
    %c0_i32_0 = arith.constant 0 : i32
    return %arg0, %c0_i32, %arg1 : i32, i32, i32
  }
  func.func @transform_1(%arg0: i32, %arg1: i32) -> (i32, i32) {
    %c0_i32 = arith.constant 0 : i32
    %c0_i32_0 = arith.constant 0 : i32
    %c0_i32_1 = arith.constant 0 : i32
    return %c0_i32, %c0_i32_0 : i32, i32
  }
  func.func @transform_2(%arg0: i32, %arg1: i32) -> (i32, i32) {
    %c0_i32 = arith.constant 0 : i32
    %c0_i32_0 = arith.constant 0 : i32
    %c0_i32_1 = arith.constant 0 : i32
    return %c0_i32, %c0_i32_0 : i32, i32
  }
  func.func @transform_3(%arg0: i32, %arg1: i32) -> (i32, i32) {
    %c0_i32 = arith.constant 0 : i32
    %c0_i32_0 = arith.constant 0 : i32
    %c0_i32_1 = arith.constant 0 : i32
    return %c0_i32, %c0_i32_0 : i32, i32
  }
  func.func @transform_4(%arg0: i32, %arg1: i32) -> (i32, i32) {
    %c0_i32 = arith.constant 0 : i32
    %c0_i32_0 = arith.constant 0 : i32
    %c0_i32_1 = arith.constant 0 : i32
    return %c0_i32, %c0_i32_0 : i32, i32
  }
  func.func @transform_5(%arg0: i32, %arg1: i32) -> (i32, i32, i32) {
    %c0_i32 = arith.constant 0 : i32
    %c0_i32_0 = arith.constant 0 : i32
    return %arg0, %c0_i32, %arg1 : i32, i32, i32
  }
}

</mosaic_0001>

<llo_original>
// kernel: tpu_custom_call.1
$region0: #{tpu_custom_call.1}
  #allocation0 [shape = 'u32[]', space=smem, size = 0x4, offset = 0x4, fixed_abs, tag = 'smem constant byte address 0x4 - core index']
  #allocation1 [shape = 'u32[144,128]{1,0:T(1,128)}', space=vmem, size = 0x12000, scoped, tag = 'internal scratch']
  %s0 = inlined_call_operand.hbm [shape: f32[2,32,256], index: 0, kind: input, shape index: {}]
  %s1 = inlined_call_operand.vmem [shape: f32[32,32], index: 1, kind: input, shape index: {}]
  %s2 = inlined_call_operand.vmem [shape: f32[32,1], index: 2, kind: input, shape index: {}]
  %s3 = inlined_call_operand.vmem [shape: f32[4,32], index: 3, kind: input, shape index: {}]
  %s4 = inlined_call_operand.vmem [shape: f32[4,1], index: 4, kind: input, shape index: {}]
  %s5 = inlined_call_operand.hbm [shape: f32[2,4,256], index: 5, kind: output, shape index: {}]
  %s6 = sld [smem:[#allocation0]]
  $region57: #{tpu_custom_call.1} parent=0
    _
  %s8 = ssub.s32 1, %s6
  %s9 = scalar_select 0, %s8, %s6
  $region1: #{tpu_custom_call.1} parent=0
    #allocation2 [shape = 'u8[65536]{0}', space=vmem, size = 0x10000, scoped, tag = 'input window, operand 0']
    #allocation3 [shape = 's32[2]{0}', space=sflag, size = 0x8, scoped, tag = 'scoped memory for tpu_custom_call.1']
    #allocation4 [shape = 's32[2]{0}', space=sflag, size = 0x8, scoped, tag = 'scoped memory for tpu_custom_call.1']
    #allocation5 [shape = 'u8[8192]{0}', space=vmem, size = 0x2000, scoped, tag = 'output window, operand 0']
    %10 = vsyncpa [#allocation3], 0
    %s11 = scalar_lea.sflag [#allocation3], 1
    %12 = vsyncpa %s11, 0
    %13 = vsyncpa [#allocation4], 0
    %s14 = scalar_lea.sflag [#allocation4], 1
    %15 = vsyncpa %s14, 0
    loop: start=0, step=1, limit=4
    $region2: #{tpu_custom_call.1} parent=1 // loop_pre_header
      _
    $region3: #{tpu_custom_call.1} parent=1 // loop_header
      %s17 = sphi 0, %s21
      %p18 = scmp.ge.s32.totalorder %s17, 4
      %s24 = sphi 0, %s36
      %s25 = sphi 0, %s32
      %s26 = sphi 0, %s24
      %s27 = sphi 0, %s25
      %s28 = sphi 0, %s26
      %s29 = sphi 0, %s27
      %s41 = sphi 0, %s43
      %s44 = sphi 0, %s41
      %s45 = sphi 0, %s44
      %s61 = sphi 0, %s45
      %s65 = sphi 0, %s65
      %s67 = sphi 0, %s65
      %s68 = sphi 0, %s67
      %s82 = sphi 0, %s68
      %s86 = sphi 0, %s86
      %s88 = sphi 0, %s86
      %s89 = sphi 0, %s88
      %s103 = sphi 0, %s89
      %s107 = sphi 0, %s107
      %s109 = sphi 0, %s107
      %s110 = sphi 0, %s109
      %s124 = sphi 0, %s110
      %s128 = sphi 0, %s128
      %s130 = sphi 0, %s128
      %s131 = sphi 0, %s130
      %s145 = sphi 0, %s131
      %s153 = sphi 0, %s155
      %s156 = sphi 0, %s153
      %s157 = sphi 0, %s156
      %s173 = sphi 0, %s157
    $region4: #{tpu_custom_call.1} parent=1 // loop_header_branch
      %20 = sbr.rel (%p18) target = $region8
    $region5: #{tpu_custom_call.1} parent=1 // loop_body
      %s22 = ssub.s32 %s17, 1
      %s23 = ssub.s32 %s17, 2
      %s30 = sadd.s32 1, %s25
      %p31 = scmp.ge.s32.totalorder %s30, 1
      %s32 = scalar_select %p31, 0, %s30
      %s33 = sadd.s32 1, %s24
      %s34 = scalar_select %p31, %s33, %s24
      %p35 = scmp.ge.s32.totalorder %s34, 2
      %s36 = scalar_select %p35, 0, %s34
      %s37 = ssub.s32 %s24, %s36
      %s38 = ssub.s32 %s25, %s32
      %s39 = sor.u32 %s37, %s38
      %p40 = scmp.eq.s32.totalorder %s39, 0
      %s42 = sadd.s32 %s41, 1
      %s43 = scalar_select %p40, %s41, %s42
      %p46 = pneg %p40
      %p47 = scmp.eq.s32.totalorder %s17, 1
      %p48 = por %p46, %p47
      %p49 = scmp.ne.s32.totalorder %s41, %s44
      %p50 = scmp.eq.s32.totalorder %s17, 0
      %p51 = por %p49, %p50
      %p52 = scmp.ne.s32.totalorder %s41, %s44
      %p53 = scmp.eq.s32.totalorder %s22, 1
      %p54 = por %p52, %p53
      %p55 = scmp.ne.s32.totalorder %s44, %s45
      %p56 = scmp.eq.s32.totalorder %s22, 0
      %p57 = por %p55, %p56
      %p58 = scmp.ne.s32.totalorder %s44, %s45
      %p59 = scmp.eq.s32.totalorder %s23, 1
      %p60 = por %p58, %p59
      %p62 = scmp.ne.s32.totalorder %s45, %s61
      %p63 = scmp.eq.s32.totalorder %s23, 0
      %p64 = por %p62, %p63
      %s66 = sadd.s32 %s65, 1
      %p69 = scmp.eq.s32.totalorder %s17, 1
      %p70 = scmp.ne.s32.totalorder %s65, %s67
      %p71 = scmp.eq.s32.totalorder %s17, 0
      %p72 = por %p70, %p71
      %p73 = scmp.ne.s32.totalorder %s65, %s67
      %p74 = scmp.eq.s32.totalorder %s22, 1
      %p75 = por %p73, %p74
      %p76 = scmp.ne.s32.totalorder %s67, %s68
      %p77 = scmp.eq.s32.totalorder %s22, 0
      %p78 = por %p76, %p77
      %p79 = scmp.ne.s32.totalorder %s67, %s68
      %p80 = scmp.eq.s32.totalorder %s23, 1
      %p81 = por %p79, %p80
      %p83 = scmp.ne.s32.totalorder %s68, %s82
      %p84 = scmp.eq.s32.totalorder %s23, 0
      %p85 = por %p83, %p84
      %s87 = sadd.s32 %s86, 1
      %p90 = scmp.eq.s32.totalorder %s17, 1
      %p91 = scmp.ne.s32.totalorder %s86, %s88
      %p92 = scmp.eq.s32.totalorder %s17, 0
      %p93 = por %p91, %p92
      %p94 = scmp.ne.s32.totalorder %s86, %s88
      %p95 = scmp.eq.s32.totalorder %s22, 1
      %p96 = por %p94, %p95
      %p97 = scmp.ne.s32.totalorder %s88, %s89
      %p98 = scmp.eq.s32.totalorder %s22, 0
      %p99 = por %p97, %p98
      %p100 = scmp.ne.s32.totalorder %s88, %s89
      %p101 = scmp.eq.s32.totalorder %s23, 1
      %p102 = por %p100, %p101
      %p104 = scmp.ne.s32.totalorder %s89, %s103
      %p105 = scmp.eq.s32.totalorder %s23, 0
      %p106 = por %p104, %p105
      %s108 = sadd.s32 %s107, 1
      %p111 = scmp.eq.s32.totalorder %s17, 1
      %p112 = scmp.ne.s32.totalorder %s107, %s109
      %p113 = scmp.eq.s32.totalorder %s17, 0
      %p114 = por %p112, %p113
      %p115 = scmp.ne.s32.totalorder %s107, %s109
      %p116 = scmp.eq.s32.totalorder %s22, 1
      %p117 = por %p115, %p116
      %p118 = scmp.ne.s32.totalorder %s109, %s110
      %p119 = scmp.eq.s32.totalorder %s22, 0
      %p120 = por %p118, %p119
      %p121 = scmp.ne.s32.totalorder %s109, %s110
      %p122 = scmp.eq.s32.totalorder %s23, 1
      %p123 = por %p121, %p122
      %p125 = scmp.ne.s32.totalorder %s110, %s124
      %p126 = scmp.eq.s32.totalorder %s23, 0
      %p127 = por %p125, %p126
      %s129 = sadd.s32 %s128, 1
      %p132 = scmp.eq.s32.totalorder %s17, 1
      %p133 = scmp.ne.s32.totalorder %s128, %s130
      %p134 = scmp.eq.s32.totalorder %s17, 0
      %p135 = por %p133, %p134
      %p136 = scmp.ne.s32.totalorder %s128, %s130
      %p137 = scmp.eq.s32.totalorder %s22, 1
      %p138 = por %p136, %p137
      %p139 = scmp.ne.s32.totalorder %s130, %s131
      %p140 = scmp.eq.s32.totalorder %s22, 0
      %p141 = por %p139, %p140
      %p142 = scmp.ne.s32.totalorder %s130, %s131
      %p143 = scmp.eq.s32.totalorder %s23, 1
      %p144 = por %p142, %p143
      %p146 = scmp.ne.s32.totalorder %s131, %s145
      %p147 = scmp.eq.s32.totalorder %s23, 0
      %p148 = por %p146, %p147
      %s149 = ssub.s32 %s24, %s36
      %s150 = ssub.s32 %s25, %s32
      %s151 = sor.u32 %s149, %s150
      %p152 = scmp.eq.s32.totalorder %s151, 0
      %s154 = sadd.s32 %s153, 1
      %s155 = scalar_select %p152, %s153, %s154
      %p158 = pneg %p152
      %p159 = scmp.eq.s32.totalorder %s17, 1
      %p160 = por %p158, %p159
      %p161 = scmp.ne.s32.totalorder %s153, %s156
      %p162 = scmp.eq.s32.totalorder %s17, 0
      %p163 = por %p161, %p162
      %p164 = scmp.ne.s32.totalorder %s153, %s156
      %p165 = scmp.eq.s32.totalorder %s22, 1
      %p166 = por %p164, %p165
      %p167 = scmp.ne.s32.totalorder %s156, %s157
      %p168 = scmp.eq.s32.totalorder %s22, 0
      %p169 = por %p167, %p168
      %p170 = scmp.ne.s32.totalorder %s156, %s157
      %p171 = scmp.eq.s32.totalorder %s23, 1
      %p172 = por %p170, %p171
      %p174 = scmp.ne.s32.totalorder %s157, %s173
      %p175 = scmp.eq.s32.totalorder %s23, 0
      %p176 = por %p174, %p175
      %p177 = scmp.le.s32.totalorder 1, %s17
      %p178 = scmp.lt.s32.totalorder %s17, 3
      %p179 = pnand %p177, %p178
      %p180 = pneg %p179
      // Predicated region
      $region9: #{tpu_custom_call.1} parent=5 // pred_check
        _
      $region10: #{tpu_custom_call.1} parent=5 // pred_check_branch
        %182 = sbr.rel (%p179) target = $region12
      $region11: #{tpu_custom_call.1} parent=5 // pred_region
        %s183 = ssub.s32 %s17, 1
        // Predicated region
        $region13: #{tpu_custom_call.1} parent=11 // pred_check
          %p184 = pneg %p78
        $region14: #{tpu_custom_call.1} parent=11 // pred_check_branch
          %186 = sbr.rel (%p184) target = $region16
        $region15: #{tpu_custom_call.1} parent=11 // pred_region
          _
        $region16: #{tpu_custom_call.1} parent=11 // pred_fallthru
          _
        // Predicated region
        $region17: #{tpu_custom_call.1} parent=11 // pred_check
          %p187 = pneg %p99
        $region18: #{tpu_custom_call.1} parent=11 // pred_check_branch
          %189 = sbr.rel (%p187) target = $region20
        $region19: #{tpu_custom_call.1} parent=11 // pred_region
          _
        $region20: #{tpu_custom_call.1} parent=11 // pred_fallthru
          _
        // Predicated region
        $region21: #{tpu_custom_call.1} parent=11 // pred_check
          %p190 = pneg %p120
        $region22: #{tpu_custom_call.1} parent=11 // pred_check_branch
          %192 = sbr.rel (%p190) target = $region24
        $region23: #{tpu_custom_call.1} parent=11 // pred_region
          _
        $region24: #{tpu_custom_call.1} parent=11 // pred_fallthru
          _
        // Predicated region
        $region25: #{tpu_custom_call.1} parent=11 // pred_check
          %p193 = pneg %p141
        $region26: #{tpu_custom_call.1} parent=11 // pred_check_branch
          %195 = sbr.rel (%p193) target = $region28
        $region27: #{tpu_custom_call.1} parent=11 // pred_region
          _
        $region28: #{tpu_custom_call.1} parent=11 // pred_fallthru
          _
      $region12: #{tpu_custom_call.1} parent=5 // pred_fallthru
        _
      %p196 = scmp.lt.s32.totalorder %s17, 2
      // Predicated region
      $region29: #{tpu_custom_call.1} parent=5 // pred_check
        %p197 = pneg %p196
      $region30: #{tpu_custom_call.1} parent=5 // pred_check_branch
        %199 = sbr.rel (%p197) target = $region32
      $region31: #{tpu_custom_call.1} parent=5 // pred_region
        // Predicated region
        $region33: #{tpu_custom_call.1} parent=31 // pred_check
          %p200 = pneg %p51
        $region34: #{tpu_custom_call.1} parent=31 // pred_check_branch
          %202 = sbr.rel (%p200) target = $region36
        $region35: #{tpu_custom_call.1} parent=31 // pred_region
          %s203 = sand.u32 %s41, 1
          %s204 = scalar_lea.sflag [#allocation3], %s203
          %s205 = sand.u32 %s41, 1
          %s206 = smul.addr %s205, 64
          %s207 = scalar_lea.vmem [#allocation2], %s206
          %s208 = smul.u32 2, %s25
          %s210 = ssub.s32 1024, 1024
          %211 = vsyncadd %s204, %s210
          %s212 = smul.addr %s24, 8
          %s213 = sadd.s32 %s208, %s212
          %s214 = smul.addr %s213, 128
          %s215 = scalar_lea.hbm %s0, %s214
          %s216 = sshll.u32 %s207, 4
          %s217 = int_to_ptr.vmem [resolvable:$true] %s216
          %222 = dma.hbm_to_vmem [thread:$0]  %s215, 1024, %s217, %s204, 256, 256, 16
        $region36: #{tpu_custom_call.1} parent=31 // pred_fallthru
          _
      $region32: #{tpu_custom_call.1} parent=5 // pred_fallthru
        _
      %p223 = scmp.le.s32.totalorder 1, %s17
      %p224 = scmp.lt.s32.totalorder %s17, 3
      %p225 = pnand %p223, %p224
      %p226 = pneg %p225
      // Predicated region
      $region37: #{tpu_custom_call.1} parent=5 // pred_check
        _
      $region38: #{tpu_custom_call.1} parent=5 // pred_check_branch
        %228 = sbr.rel (%p225) target = $region40
      $region39: #{tpu_custom_call.1} parent=5 // pred_region
        %s229 = ssub.s32 %s17, 1
        %s230 = sand.u32 %s44, 1
        %s231 = scalar_lea.sflag [#allocation3], %s230
        %s232 = sand.u32 %s44, 1
        %s233 = smul.addr %s232, 64
        %s234 = scalar_lea.vmem [#allocation2], %s233
        // Predicated region
        $region41: #{tpu_custom_call.1} parent=39 // pred_check
          %p235 = pneg %p57
        $region42: #{tpu_custom_call.1} parent=39 // pred_check_branch
          %237 = sbr.rel (%p235) target = $region44
        $region43: #{tpu_custom_call.1} parent=39 // pred_region
          %238 = dma.done %s231, 1024
        $region44: #{tpu_custom_call.1} parent=39 // pred_fallthru
          _
        %s239 = sand.u32 %s44, 1
        %s240 = scalar_lea.sflag [#allocation3], %s239
        %s241 = sand.u32 %s44, 1
        %s242 = smul.addr %s241, 64
        %s243 = scalar_lea.vmem [#allocation2], %s242
        %p244 = pneg %p57
        %p245 = pneg %p54
        %p246 = pneg %p78
        %p247 = pneg %p75
        %p248 = pneg %p99
        %p249 = pneg %p96
        %p250 = pneg %p120
        %p251 = pneg %p117
        %p252 = pneg %p141
        %p253 = pneg %p138
        %p254 = pneg %p169
        %p255 = pneg %p166
        %s256 = sand.u32 %s156, 1
        %s257 = scalar_lea.sflag [#allocation4], %s256
        %s258 = sand.u32 %s156, 1
        %s259 = smul.addr %s258, 8
        %s260 = scalar_lea.vmem [#allocation5], %s259
        %s261 = smul.u32 2, %s27
        %s262 = smul.u32 2, %s27
        %v263 = vld [vmem:[%s234] sm:$0xff]
        %v264 = vld [vmem:[%s234 + $0x8] sm:$0xff]
        %v265 = vld [vmem:[%s234 + $0x10] sm:$0xff]
        %v266 = vld [vmem:[%s234 + $0x18] sm:$0xff]
        %v267 = vld [vmem:[%s234 + $0x20] sm:$0xff]
        %v268 = vld [vmem:[%s234 + $0x28] sm:$0xff]
        %v269 = vld [vmem:[%s234 + $0x30] sm:$0xff]
        %v270 = vld [vmem:[%s234 + $0x38] sm:$0xff]
        %v271 = vld [vmem:[%s1] sm:$0xff]
        %v272 = vld [vmem:[%s1 + $0x8] sm:$0xff]
        %v273 = vld [vmem:[%s1 + $0x10] sm:$0xff]
        %v274 = vld [vmem:[%s1 + $0x18] sm:$0xff]
        %v275 = vld [vmem:[%s2] sm:$0xff]
        %v276 = vld [vmem:[%s2 + $0x8] sm:$0xff]
        %v277 = vld [vmem:[%s2 + $0x10] sm:$0xff]
        %v278 = vld [vmem:[%s2 + $0x18] sm:$0xff]
        %280 = vset.pattern.permute.xlu0 0
        %281 = vperm.xlu0 %280, %v275
        %v282 = vpop.permute.xlu0 %281
        %285 = vset.pattern.permute.xlu0 0
        %286 = vperm.xlu0 %285, %v276
        %v287 = vpop.permute.xlu0 %286
        %290 = vset.pattern.permute.xlu0 0
        %291 = vperm.xlu0 %290, %v277
        %v292 = vpop.permute.xlu0 %291
        %295 = vset.pattern.permute.xlu0 0
        %296 = vperm.xlu0 %295, %v278
        %v297 = vpop.permute.xlu0 %296
        %vm299 = vcmask 261120
        %v301 = vsel %vm299, %v271, 0
        %v304 = vsel %vm299, %v272, 0
        %v307 = vsel %vm299, %v273, 0
        %v310 = vsel %vm299, %v274, 0
        %312 = vmatprep.subr.mxu0 %v264
        %313 = vmatpush1.msra.mxu0 %v263
        %314 = vmatprep.subr.mxu0 %v266
        %315 = vmatpush1.msra.mxu0 %v265
        %316 = vmatprep.subr.mxu0 %v268
        %317 = vmatpush1.msra.mxu0 %v267
        %318 = vmatprep.subr.mxu0 %v270
        %319 = vmatpush1.msra.mxu0 %v269
        %320 = vmatprep.subr.mxu0 0.0
        %321 = vmatpush1.msra.mxu0 0.0
        %322 = vmatprep.subr.mxu0 0.0
        %323 = vmatpush1.msra.mxu0 0.0
        %324 = vmatprep.subr.mxu0 0.0
        %325 = vmatpush1.msra.mxu0 0.0
        %326 = vmatprep.subr.mxu0 0.0
        %327 = vmatpush1.msra.mxu0 0.0
        %328 = vmatprep.subr.mxu0 0.0
        %329 = vmatpush1.msra.mxu0 0.0
        %330 = vmatprep.subr.mxu0 0.0
        %331 = vmatpush1.msra.mxu0 0.0
        %332 = vmatprep.subr.mxu0 0.0
        %333 = vmatpush1.msra.mxu0 0.0
        %334 = vmatprep.subr.mxu0 0.0
        %335 = vmatpush1.msra.mxu0 0.0
        %336 = vmatprep.subr.mxu0 0.0
        %337 = vmatpush1.msra.mxu0 0.0
        %338 = vmatprep.subr.mxu0 0.0
        %339 = vmatpush1.msra.mxu0 0.0
        %340 = vmatprep.subr.mxu0 0.0
        %341 = vmatpush1.msra.mxu0 0.0
        %342 = vmatprep.subr.mxu0 0.0
        %343 = vmatpush1.msra.mxu0 0.0
        %344 = vmatprep.subr.mxu0 0.0
        %345 = vmatpush1.msra.mxu0 0.0
        %346 = vmatprep.subr.mxu0 0.0
        %347 = vmatpush1.msra.mxu0 0.0
        %348 = vmatprep.subr.mxu0 0.0
        %349 = vmatpush1.msra.mxu0 0.0
        %350 = vmatprep.subr.mxu0 0.0
        %351 = vmatpush1.msra.mxu0 0.0
        %352 = vmatprep.subr.mxu0 0.0
        %353 = vmatpush1.msra.mxu0 0.0
        %354 = vmatprep.subr.mxu0 0.0
        %355 = vmatpush1.msra.mxu0 0.0
        %356 = vmatprep.subr.mxu0 0.0
        %357 = vmatpush1.msra.mxu0 0.0
        %358 = vmatprep.subr.mxu0 0.0
        %359 = vmatpush1.msra.mxu0 0.0
        %360 = vmatprep.subr.mxu0 0.0
        %361 = vmatpush1.msra.mxu0 0.0
        %362 = vmatprep.subr.mxu0 0.0
        %363 = vmatpush1.msra.mxu0 0.0
        %364 = vmatprep.subr.mxu0 0.0
        %365 = vmatpush1.msra.mxu0 0.0
        %366 = vmatprep.subr.mxu0 0.0
        %367 = vmatpush1.msra.mxu0 0.0
        %368 = vmatprep.subr.mxu0 0.0
        %369 = vmatpush1.msra.mxu0 0.0
        %370 = vmatprep.subr.mxu0 0.0
        %371 = vmatpush1.msra.mxu0 0.0
        %372 = vmatprep.subr.mxu0 0.0
        %373 = vmatpush1.msra.mxu0 0.0
        %374 = vmatprep.subr.mxu0 0.0
        %375 = vmatpush1.msra.mxu0 0.0
        %376 = vmatprep.mubr.f32.mxu0 0.0
        %377 = vmatmul.mubr.f32.gmra.mrb[0].mxu0 %v301
        %v378 = vpop.f32.mrb[0].mxu0
        %v379 = vadd.f32 %v282, %v378
        %v380 = vpop.f32.mrb[0].mxu0
        %v381 = vadd.f32 %v282, %v380
        %382 = vmatprep.mubr.f32.mxu0 0.0
        %383 = vmatmul.mubr.f32.gmra.mrb[0].mxu0 %v304
        %v384 = vpop.f32.mrb[0].mxu0
        %v385 = vadd.f32 %v287, %v384
        %v386 = vpop.f32.mrb[0].mxu0
        %v387 = vadd.f32 %v287, %v386
        %388 = vmatprep.mubr.f32.mxu0 0.0
        %389 = vmatmul.mubr.f32.gmra.mrb[0].mxu0 %v307
        %v390 = vpop.f32.mrb[0].mxu0
        %v391 = vadd.f32 %v292, %v390
        %v392 = vpop.f32.mrb[0].mxu0
        %v393 = vadd.f32 %v292, %v392
        %394 = vmatprep.mubr.f32.mxu0 0.0
        %395 = vmatmul.mubr.f32.gmra.mrb[0].mxu0 %v310
        %v396 = vpop.f32.mrb[0].mxu0
        %v397 = vadd.f32 %v297, %v396
        %v398 = vpop.f32.mrb[0].mxu0
        %v399 = vadd.f32 %v297, %v398
        %400 = vdwg.mxu0
        %v401 = vmul.f32 %v379, %v379
        %v402 = vmul.f32 %v381, %v381
        %v403 = vmul.f32 %v385, %v385
        %v404 = vmul.f32 %v387, %v387
        %v405 = vmul.f32 %v391, %v391
        %v406 = vmul.f32 %v393, %v393
        %v407 = vmul.f32 %v397, %v397
        %v408 = vmul.f32 %v399, %v399
        %v409 = vmul.f32 %v379, %v401
        %v410 = vmul.f32 %v381, %v402
        %v411 = vmul.f32 %v385, %v403
        %v412 = vmul.f32 %v387, %v404
        %v413 = vmul.f32 %v391, %v405
        %v414 = vmul.f32 %v393, %v406
        %v415 = vmul.f32 %v397, %v407
        %v416 = vmul.f32 %v399, %v408
        %v417 = vmul.f32 %v409, 0.044715
        %v418 = vmul.f32 %v410, 0.044715
        %v419 = vmul.f32 %v411, 0.044715
        %v420 = vmul.f32 %v412, 0.044715
        %v421 = vmul.f32 %v413, 0.044715
        %v422 = vmul.f32 %v414, 0.044715
        %v423 = vmul.f32 %v415, 0.044715
        %v424 = vmul.f32 %v416, 0.044715
        %v425 = vadd.f32 %v379, %v417
        %v426 = vadd.f32 %v381, %v418
        %v427 = vadd.f32 %v385, %v419
        %v428 = vadd.f32 %v387, %v420
        %v429 = vadd.f32 %v391, %v421
        %v430 = vadd.f32 %v393, %v422
        %v431 = vadd.f32 %v397, %v423
        %v432 = vadd.f32 %v399, %v424
        %v433 = vmul.f32 %v425, 0.7978846
        %v434 = vmul.f32 %v426, 0.7978846
        %v435 = vmul.f32 %v427, 0.7978846
        %v436 = vmul.f32 %v428, 0.7978846
        %v437 = vmul.f32 %v429, 0.7978846
        %v438 = vmul.f32 %v430, 0.7978846
        %v439 = vmul.f32 %v431, 0.7978846
        %v440 = vmul.f32 %v432, 0.7978846
        %v441 = vtanh.pop %v433
        %v442 = vtanh.pop %v434
        %v443 = vtanh.pop %v435
        %v444 = vtanh.pop %v436
        %v445 = vtanh.pop %v437
        %v446 = vtanh.pop %v438
        %v447 = vtanh.pop %v439
        %v448 = vtanh.pop %v440
        %v449 = vadd.f32 %v441, 1.0
        %v450 = vadd.f32 %v442, 1.0
        %v451 = vadd.f32 %v443, 1.0
        %v452 = vadd.f32 %v444, 1.0
        %v453 = vadd.f32 %v445, 1.0
        %v454 = vadd.f32 %v446, 1.0
        %v455 = vadd.f32 %v447, 1.0
        %v456 = vadd.f32 %v448, 1.0
        %v457 = vmul.f32 %v449, 0.5
        %v458 = vmul.f32 %v450, 0.5
        %v459 = vmul.f32 %v451, 0.5
        %v460 = vmul.f32 %v452, 0.5
        %v461 = vmul.f32 %v453, 0.5
        %v462 = vmul.f32 %v454, 0.5
        %v463 = vmul.f32 %v455, 0.5
        %v464 = vmul.f32 %v456, 0.5
        %v465 = vmul.f32 %v379, %v457
        %v466 = vmul.f32 %v381, %v458
        %v467 = vmul.f32 %v385, %v459
        %v468 = vmul.f32 %v387, %v460
        %v469 = vmul.f32 %v391, %v461
        %v470 = vmul.f32 %v393, %v462
        %v471 = vmul.f32 %v397, %v463
        %v472 = vmul.f32 %v399, %v464
        %v473 = vld [vmem:[%s3] sm:$0xf]
        %v474 = vld [vmem:[%s4] sm:$0xf]
        %476 = vset.pattern.permute.xlu0 0
        %477 = vperm.xlu0 %476, %v474
        %v478 = vpop.permute.xlu0 %477
        %v481 = vsel %vm299, %v473, 0
        %483 = vmatprep.subr.mxu0 %v466
        %484 = vmatpush1.msra.mxu0 %v465
        %485 = vmatprep.subr.mxu0 %v468
        %486 = vmatpush1.msra.mxu0 %v467
        %487 = vmatprep.subr.mxu0 %v470
        %488 = vmatpush1.msra.mxu0 %v469
        %489 = vmatprep.subr.mxu0 %v472
        %490 = vmatpush1.msra.mxu0 %v471
        %491 = vmatprep.subr.mxu0 0.0
        %492 = vmatpush1.msra.mxu0 0.0
        %493 = vmatprep.subr.mxu0 0.0
        %494 = vmatpush1.msra.mxu0 0.0
        %495 = vmatprep.subr.mxu0 0.0
        %496 = vmatpush1.msra.mxu0 0.0
        %497 = vmatprep.subr.mxu0 0.0
        %498 = vmatpush1.msra.mxu0 0.0
        %499 = vmatprep.subr.mxu0 0.0
        %500 = vmatpush1.msra.mxu0 0.0
        %501 = vmatprep.subr.mxu0 0.0
        %502 = vmatpush1.msra.mxu0 0.0
        %503 = vmatprep.subr.mxu0 0.0
        %504 = vmatpush1.msra.mxu0 0.0
        %505 = vmatprep.subr.mxu0 0.0
        %506 = vmatpush1.msra.mxu0 0.0
        %507 = vmatprep.subr.mxu0 0.0
        %508 = vmatpush1.msra.mxu0 0.0
        %509 = vmatprep.subr.mxu0 0.0
        %510 = vmatpush1.msra.mxu0 0.0
        %511 = vmatprep.subr.mxu0 0.0
        %512 = vmatpush1.msra.mxu0 0.0
        %513 = vmatprep.subr.mxu0 0.0
        %514 = vmatpush1.msra.mxu0 0.0
        %515 = vmatprep.subr.mxu0 0.0
        %516 = vmatpush1.msra.mxu0 0.0
        %517 = vmatprep.subr.mxu0 0.0
        %518 = vmatpush1.msra.mxu0 0.0
        %519 = vmatprep.subr.mxu0 0.0
        %520 = vmatpush1.msra.mxu0 0.0
        %521 = vmatprep.subr.mxu0 0.0
        %522 = vmatpush1.msra.mxu0 0.0
        %523 = vmatprep.subr.mxu0 0.0
        %524 = vmatpush1.msra.mxu0 0.0
        %525 = vmatprep.subr.mxu0 0.0
        %526 = vmatpush1.msra.mxu0 0.0
        %527 = vmatprep.subr.mxu0 0.0
        %528 = vmatpush1.msra.mxu0 0.0
        %529 = vmatprep.subr.mxu0 0.0
        %530 = vmatpush1.msra.mxu0 0.0
        %531 = vmatprep.subr.mxu0 0.0
        %532 = vmatpush1.msra.mxu0 0.0
        %533 = vmatprep.subr.mxu0 0.0
        %534 = vmatpush1.msra.mxu0 0.0
        %535 = vmatprep.subr.mxu0 0.0
        %536 = vmatpush1.msra.mxu0 0.0
        %537 = vmatprep.subr.mxu0 0.0
        %538 = vmatpush1.msra.mxu0 0.0
        %539 = vmatprep.subr.mxu0 0.0
        %540 = vmatpush1.msra.mxu0 0.0
        %541 = vmatprep.subr.mxu0 0.0
        %542 = vmatpush1.msra.mxu0 0.0
        %543 = vmatprep.subr.mxu0 0.0
        %544 = vmatpush1.msra.mxu0 0.0
        %545 = vmatprep.subr.mxu0 0.0
        %546 = vmatpush1.msra.mxu0 0.0
        %547 = vmatprep.mubr.f32.mxu0 0.0
        %548 = vmatmul.mubr.f32.gmra.mrb[0].mxu0 %v481
        %v549 = vpop.f32.mrb[0].mxu0
        %v550 = vadd.f32 %v478, %v549
        %v551 = vpop.f32.mrb[0].mxu0
        %v552 = vadd.f32 %v478, %v551
        %553 = vdwg.mxu0
        %v556 = vcombine.low %v550, %v552
        %558 = vst [vmem:[%s260] sm:$0xff] %v556
        %s559 = sand.u32 %s156, 1
        %s560 = scalar_lea.sflag [#allocation4], %s559
        %s561 = sand.u32 %s156, 1
        %s562 = smul.addr %s561, 8
        %s563 = scalar_lea.vmem [#allocation5], %s562
        // Predicated region
        $region45: #{tpu_custom_call.1} parent=39 // pred_check
          %p564 = pneg %p166
        $region46: #{tpu_custom_call.1} parent=39 // pred_check_branch
          %566 = sbr.rel (%p564) target = $region48
        $region47: #{tpu_custom_call.1} parent=39 // pred_region
          %s567 = smul.u32 2, %s27
          %s569 = ssub.s32 128, 128
          %570 = vsyncadd %s560, %s569
          %s571 = smul.addr %s26, 2
          %s572 = sadd.s32 %s567, %s571
          %s573 = smul.addr %s572, 64
          %s574 = scalar_lea.hbm %s5, %s573
          %s576 = sshll.u32 %s563, 4
          %s577 = int_to_ptr.vmem [resolvable:$true] %s576
          %579 = dma.vmem_to_hbm [thread:$0]  %s577, 128, %s574, %s560
        $region48: #{tpu_custom_call.1} parent=39 // pred_fallthru
          _
      $region40: #{tpu_custom_call.1} parent=5 // pred_fallthru
        _
      %p580 = scmp.le.s32.totalorder 2, %s17
      // Predicated region
      $region49: #{tpu_custom_call.1} parent=5 // pred_check
        %p581 = pneg %p580
      $region50: #{tpu_custom_call.1} parent=5 // pred_check_branch
        %583 = sbr.rel (%p581) target = $region52
      $region51: #{tpu_custom_call.1} parent=5 // pred_region
        %s584 = ssub.s32 %s17, 2
        // Predicated region
        $region53: #{tpu_custom_call.1} parent=51 // pred_check
          %p585 = pneg %p172
        $region54: #{tpu_custom_call.1} parent=51 // pred_check_branch
          %587 = sbr.rel (%p585) target = $region56
        $region55: #{tpu_custom_call.1} parent=51 // pred_region
          %s588 = sand.u32 %s157, 1
          %s589 = scalar_lea.sflag [#allocation4], %s588
          %s590 = sand.u32 %s157, 1
          %s591 = smul.addr %s590, 8
          %s592 = scalar_lea.vmem [#allocation5], %s591
          %593 = dma.done %s589, 128
        $region56: #{tpu_custom_call.1} parent=51 // pred_fallthru
          _
      $region52: #{tpu_custom_call.1} parent=5 // pred_fallthru
        _
    $region6: #{tpu_custom_call.1} parent=1 // loop_footer
      %s21 = sadd.s32 1, %s17
    $region7: #{tpu_custom_call.1} parent=1 // loop_footer_branch
      %16 = sbr.rel target = $region3
    $region8: #{tpu_custom_call.1} parent=1 // loop_exit
      _
    %594 = vsyncpa [#allocation3], 1
    %s595 = scalar_lea.sflag [#allocation3], 1
    %596 = vsyncpa %s595, 1
    %597 = vsyncpa [#allocation4], 1
    %s598 = scalar_lea.sflag [#allocation4], 1
    %599 = vsyncpa %s598, 1

</llo_original>
